<compile_context>
chip_gen: v7x
topology: tpu7x:2x2x1
jax: 0.10.0
libtpu: 0.0.40
codegen_flags: <defaults>
</compile_context>

<pallas_src>
import functools
import math

import jax
import jax.numpy as jnp
from jax.experimental import pallas as pl
from jax.experimental.pallas import tpu as pltpu


def _scale_exp_mul_kernel(x_ref, s_ref, y_ref, *, reverse):
    # y = x * exp(+/- scale).  exp -> EUP slot, multiply -> VPU; both are free
    # filler in this HBM-streaming kernel.  Compute in f32, cast back on store.
    s = s_ref[...].astype(jnp.float32)
    f = jnp.exp(-s) if reverse else jnp.exp(s)
    y_ref[...] = (x_ref[...].astype(jnp.float32) * f).astype(y_ref.dtype)


def _sublane_multiple(dtype) -> int:
    # Packed-sublane multiple: 8 for 32-bit, 16 for 16-bit, 32 for 8-bit dtypes.
    return max(8, 256 // (jnp.dtype(dtype).itemsize * 8))


def _round_up(a: int, m: int) -> int:
    return -(-a // m) * m


def _tile_budget_bytes() -> int:
    # Generation-aware per-tile budget for the streamed x / y tiles.
    try:
        kind = jax.devices()[0].device_kind.lower()
    except Exception:  # pragma: no cover - defensive only
        kind = ""
    if "v7" in kind:
        return 8 * 1024 * 1024  # v7x: ~3.2 TB/s HBM -> bigger tiles hide overhead
    return 4 * 1024 * 1024      # v5e / v6e (explicit vmem_limit_bytes set below)


@functools.partial(jax.jit, static_argnames=("reverse",))
def scaling_forward(x, scale, reverse: bool = False):
    """NICE Scaling layer: returns (x * exp(+/- scale), sum(scale))."""
    B, D = x.shape
    log_det = jnp.sum(scale)

    itemsize = jnp.dtype(x.dtype).itemsize
    sub = _sublane_multiple(x.dtype)
    budget = _tile_budget_bytes()

    # ---- lane-dense folding (pad rows instead of falling back) --------------
    if D % 128 == 0:
        k = 1
        b_pad = B
        x_padded = x
    else:
        k = 128 // math.gcd(D, 128)          # D * k == lcm(D, 128), 128-aligned
        b_pad = _round_up(B, k)
        x_padded = jnp.pad(x, ((0, b_pad - B), (0, 0))) if b_pad != B else x

    rows, L = b_pad // k, D * k
    x2 = x_padded.reshape(rows, L)
    s2 = jnp.tile(scale.reshape(1, D).astype(jnp.float32), (1, k))   # (1, L)

    # ---- lane tiling (only if one sub-row block would blow the budget) ------
    if itemsize * sub * L > budget:
        tl = max(128, (budget // (itemsize * sub)) // 128 * 128)
    else:
        tl = L

    # ---- row tiling: dtype-aware sublane multiple, VMEM budget, >=4 steps ---
    if rows <= sub:
        tb = rows                            # full extent: always a legal block
    else:
        tb_cap = max(sub, (budget // (itemsize * tl)) // sub * sub)
        tb = min(rows, tb_cap)
        # aim for ~4+ grid steps so the batch axis can shard across both
        # v7x TensorCores and keep the DMA pipeline busy.
        tb_parallel = max(sub, _round_up(-(-rows // 4), sub))
        tb = min(tb, tb_parallel)

    grid = (pl.cdiv(rows, tb), pl.cdiv(L, tl))

    # Explicit scoped-VMEM limit: 2 buffers each for the x and y tiles plus the
    # tiny resident scale row and headroom.  Floor 32 MiB (default on v6e/v7x,
    # safe on v5e's 128 MiB), cap 48 MiB (under v7x's 64 MiB physical VMEM).
    tile_bytes = tb * tl * itemsize
    factor_bytes = tl * 4
    vmem_limit = int(min(max(2 * (2 * tile_bytes + factor_bytes) + (2 << 20),
                             32 << 20),
                         48 << 20))

    kernel = functools.partial(_scale_exp_mul_kernel, reverse=reverse)
    y2 = pl.pallas_call(
        kernel,
        out_shape=jax.ShapeDtypeStruct((rows, L), x.dtype),
        grid=grid,
        in_specs=[
            pl.BlockSpec((tb, tl), lambda i, j: (i, j)),   # streamed x tiles
            pl.BlockSpec((1, tl), lambda i, j: (0, j)),    # resident scale row
        ],
        out_specs=pl.BlockSpec((tb, tl), lambda i, j: (i, j)),
        compiler_params=pltpu.CompilerParams(
            dimension_semantics=("parallel", "parallel"),
            vmem_limit_bytes=vmem_limit,
        ),
    )(x2, s2)

    y = y2.reshape(b_pad, D)[:B]
    return y, log_det


if __name__ == "__main__":
    key = jax.random.PRNGKey(0)
    k_x, k_s, k_x2, k_s2, k_x3 = jax.random.split(key, 5)

    # Case 1: small dim (D < 128) exercises the lane-dense folding path.
    batch, dim = 8, 32
    x = jax.random.normal(k_x, (batch, dim), dtype=jnp.float32)
    scale = 0.1 * jax.random.normal(k_s, (1, dim), dtype=jnp.float32)

    y_fwd, ld_fwd = scaling_forward(x, scale, reverse=False)
    y_rev, ld_rev = scaling_forward(x, scale, reverse=True)
    jax.block_until_ready((y_fwd, ld_fwd, y_rev, ld_rev))

    assert jnp.allclose(y_fwd, x * jnp.exp(scale), atol=1e-6, rtol=1e-6)
    assert jnp.allclose(y_rev, x * jnp.exp(-scale), atol=1e-6, rtol=1e-6)
    assert jnp.allclose(ld_fwd, jnp.sum(scale), atol=1e-6, rtol=1e-6)
    assert jnp.allclose(ld_rev, jnp.sum(scale), atol=1e-6, rtol=1e-6)

    # Case 2: lane-aligned dim (D % 128 == 0) exercises the direct tiled path.
    batch2, dim2 = 64, 256
    x2 = jax.random.normal(k_x2, (batch2, dim2), dtype=jnp.float32)
    scale2 = 0.05 * jax.random.normal(k_s2, (1, dim2), dtype=jnp.float32)

    y2_fwd, ld2 = scaling_forward(x2, scale2, reverse=False)
    jax.block_until_ready((y2_fwd, ld2))
    assert jnp.allclose(y2_fwd, x2 * jnp.exp(scale2), atol=1e-6, rtol=1e-6)
    assert jnp.allclose(ld2, jnp.sum(scale2), atol=1e-6, rtol=1e-6)

    # Case 3: batch not divisible by the fold factor exercises row padding.
    batch3, dim3 = 5, 32
    x3 = jax.random.normal(k_x3, (batch3, dim3), dtype=jnp.float32)
    y3_fwd, ld3 = scaling_forward(x3, scale, reverse=False)
    jax.block_until_ready((y3_fwd, ld3))
    assert y3_fwd.shape == (batch3, dim3)
    assert jnp.allclose(y3_fwd, x3 * jnp.exp(scale), atol=1e-6, rtol=1e-6)
    assert jnp.allclose(ld3, jnp.sum(scale), atol=1e-6, rtol=1e-6)

    print("KERNEL_OK")
</pallas_src>

<mosaic_0001>
module attributes {stable_mosaic.version = 11 : i64} {
  func.func @_scale_exp_mul_kernel(%arg0: i32, %arg1: i32, %arg2: memref<2x128xf32, #tpu.memory_space<vmem>>, %arg3: memref<1x128xf32, #tpu.memory_space<vmem>>, %arg4: memref<2x128xf32, #tpu.memory_space<vmem>>) attributes {dimension_semantics = [#tpu.dimension_semantics<parallel>, #tpu.dimension_semantics<parallel>], iteration_bounds = array<i64: 1, 1>, scalar_prefetch = 0 : i64, scratch_operands = 0 : i64, tpu.core_type = #tpu.core_type<tc>, window_params = [{transform_indices = @transform_0, window_bounds = array<i64: 2, 128>}, {transform_indices = @transform_1, window_bounds = array<i64: 1, 128>}, {transform_indices = @transform_2, window_bounds = array<i64: 2, 128>}]} {
    %c0 = arith.constant 0 : index
    %c0_0 = arith.constant 0 : index
    %0 = vector.load %arg3[%c0, %c0_0] : memref<1x128xf32, #tpu.memory_space<vmem>>, vector<1x128xf32>
    %1 = math.exp %0 : vector<1x128xf32>
    %c0_1 = arith.constant 0 : index
    %c0_2 = arith.constant 0 : index
    %2 = vector.load %arg2[%c0_1, %c0_2] : memref<2x128xf32, #tpu.memory_space<vmem>>, vector<2x128xf32>
    %3 = vector.broadcast %1 : vector<1x128xf32> to vector<2x128xf32>
    %4 = arith.mulf %2, %3 : vector<2x128xf32>
    %c0_3 = arith.constant 0 : index
    %c0_4 = arith.constant 0 : index
    %5 = vector.load %arg4[%c0_3, %c0_4] : memref<2x128xf32, #tpu.memory_space<vmem>>, vector<2x128xf32>
    tpu.vector_store %arg4[%c0_3, %c0_4], %4 {strides = array<i32>} : memref<2x128xf32, #tpu.memory_space<vmem>>, vector<2x128xf32>,
    return
  }
  func.func @transform_0(%arg0: i32, %arg1: i32) -> (i32, i32) {
    %c0_i32 = arith.constant 0 : i32
    return %arg0, %arg1 : i32, i32
  }
  func.func @transform_1(%arg0: i32, %arg1: i32) -> (i32, i32) {
    %c0_i32 = arith.constant 0 : i32
    %c0_i32_0 = arith.constant 0 : i32
    return %c0_i32, %arg1 : i32, i32
  }
  func.func @transform_2(%arg0: i32, %arg1: i32) -> (i32, i32) {
    %c0_i32 = arith.constant 0 : i32
    return %arg0, %arg1 : i32, i32
  }
}

</mosaic_0001>

<llo_original>
// kernel: scaling_forward.1
$region0: #{scaling_forward.1}
  #allocation0 [shape = 'u32[]', space=smem, size = 0x4, offset = 0x4, fixed_abs, tag = 'smem constant byte address 0x4 - core index']
  #allocation1 [shape = 'u32[144,128]{1,0:T(1,128)}', space=vmem, size = 0x12000, scoped, tag = 'internal scratch']
  %s0 = inlined_call_operand.vmem [shape: f32[2,128], index: 0, kind: input, shape index: {}]
  %s1 = inlined_call_operand.vmem [shape: f32[1,128], index: 1, kind: input, shape index: {}]
  %s2 = inlined_call_operand.vmem [shape: f32[2,128], index: 2, kind: output, shape index: {}]
  %s3 = sld [smem:[#allocation0]]
  $region18: #{scaling_forward.1} parent=0
    _
  %s5 = ssub.s32 1, %s3
  %s6 = scalar_select 0, %s5, %s3
  // Predicated region
  $region2: #{scaling_forward.1} parent=0 // pred_check
    _
  $region3: #{scaling_forward.1} parent=0 // pred_check_branch
    %8 = sbr.rel (0) target = $region5
  $region4: #{scaling_forward.1} parent=0 // pred_region
    _
  $region5: #{scaling_forward.1} parent=0 // pred_fallthru
    _
  // Predicated region
  $region6: #{scaling_forward.1} parent=0 // pred_check
    _
  $region7: #{scaling_forward.1} parent=0 // pred_check_branch
    %10 = sbr.rel (0) target = $region9
  $region8: #{scaling_forward.1} parent=0 // pred_region
    _
  $region9: #{scaling_forward.1} parent=0 // pred_fallthru
    _
  %v11 = vld [vmem:[%s1] sm:$0x1]
  %v12 = vmul.f32 %v11, 1.442695
  %v13 = vpow.pop %v12
  %v14 = vld [vmem:[%s0] sm:$0x3]
  %v16 = vlaneseq
  %v17 = vshrl.u32 %v16, 7
  %v18 = vsub.s32 0, %v17
  %v19 = vrot.slane %v13, %v18
  %v21 = vmul.f32 %v14, %v19
  %22 = vst [vmem:[%s2] sm:$0x3] %v21
  // Predicated region
  $region10: #{scaling_forward.1} parent=0 // pred_check
    _
  $region11: #{scaling_forward.1} parent=0 // pred_check_branch
    %24 = sbr.rel (0) target = $region13
  $region12: #{scaling_forward.1} parent=0 // pred_region
    _
  $region13: #{scaling_forward.1} parent=0 // pred_fallthru
    _
  // Predicated region
  $region14: #{scaling_forward.1} parent=0 // pred_check
    _
  $region15: #{scaling_forward.1} parent=0 // pred_check_branch
    %26 = sbr.rel (0) target = $region17
  $region16: #{scaling_forward.1} parent=0 // pred_region
    _
  $region17: #{scaling_forward.1} parent=0 // pred_fallthru
    _

</llo_original>
